<compile_context>
chip_gen: v7x
topology: tpu7x:2x2x1
jax: 0.10.0
libtpu: 0.0.40
codegen_flags: <defaults>
</compile_context>

<pallas_src>
import functools

import jax
import jax.numpy as jnp
from jax.experimental import pallas as pl
from jax.experimental.pallas import tpu as pltpu


def _round_up(x, m):
    return (x + m - 1) // m * m


# ---------------------------------------------------------------------------
# Kernel
# ---------------------------------------------------------------------------
def _env_model_kernel(state_ref, action_ref, w_ref, b_ref, out_ref, *,
                      sd, ad, h):
    """Fused env-model forward.

    w_ref rows (all sections 8-sublane aligned, lane width = h):
      [0            : sd           ]  W1 rows for `state`
      [off_w1a      : off_w1a + ad ]  W1 rows for `action`
      [off_wh1      : off_wh1 + h  ]  fused head-1  [Ws1 | Wr1]
      [off_wh2      : off_wh2 + h  ]  block-diag head-2, lane-padded to h
    b_ref rows: 0 = b1, 1 = [bs1 | br1], 2 = [bs2, br2, 0...]
    """
    off_w1a = _round_up(sd, 8)
    off_wh1 = off_w1a + _round_up(ad, 8)
    off_wh2 = off_wh1 + h

    state = state_ref[...]
    action = action_ref[...]
    b = b_ref[...]

    # features = ReLU(state @ W1s + action @ W1a + b1)
    f = jnp.dot(state, w_ref[0:sd, :], preferred_element_type=jnp.float32)
    f = f + jnp.dot(action, w_ref[off_w1a:off_w1a + ad, :],
                    preferred_element_type=jnp.float32)
    f = jnp.maximum(f + b[0:1, :], 0.0)

    # fused head layer 1: [B,h] @ [h,h]  (lanes 0:h/2 = state head, h/2:h = reward head)
    hcat = jnp.dot(f, w_ref[off_wh1:off_wh1 + h, :],
                   preferred_element_type=jnp.float32)
    hcat = jnp.maximum(hcat + b[1:2, :], 0.0)

    # fused head layer 2 (block diagonal, lane padded): [B,h] @ [h,h]
    y = jnp.dot(hcat, w_ref[off_wh2:off_wh2 + h, :],
                preferred_element_type=jnp.float32)
    y = y + b[2:3, :]

    # Lane-dense full-width store, then residual add on the state lanes.
    out_ref[...] = y.astype(out_ref.dtype)
    out_ref[:, 0:sd] = (y[:, 0:sd] + state).astype(out_ref.dtype)


# ---------------------------------------------------------------------------
# Parameter packing (done once, outside the kernel)
# ---------------------------------------------------------------------------
def pack_params(raw, state_dim, action_dim, hidden):
    """Fold the 12 raw nn.Linear tensors into one weight slab and one bias slab."""
    assert hidden % 128 == 0 and hidden >= state_dim + 1
    h2 = hidden // 2
    off_w1a = _round_up(state_dim, 8)
    off_wh1 = off_w1a + _round_up(action_dim, 8)
    off_wh2 = off_wh1 + hidden
    rows = off_wh2 + hidden

    w = jnp.zeros((rows, hidden), jnp.float32)
    # layer 1, split between state rows and action rows
    w = w.at[0:state_dim, :].set(raw["w1"][:state_dim, :])
    w = w.at[off_w1a:off_w1a + action_dim, :].set(raw["w1"][state_dim:, :])
    # fused head layer 1: [Ws1 | Wr1]
    w = w.at[off_wh1:off_wh1 + hidden, 0:h2].set(raw["ws1"])
    w = w.at[off_wh1:off_wh1 + hidden, h2:hidden].set(raw["wr1"])
    # fused head layer 2: block diagonal, lane-padded
    w = w.at[off_wh2:off_wh2 + h2, 0:state_dim].set(raw["ws2"])
    w = w.at[off_wh2 + h2:off_wh2 + hidden,
             state_dim:state_dim + 1].set(raw["wr2"])

    b = jnp.zeros((3, hidden), jnp.float32)
    b = b.at[0:1, :].set(raw["b1"])
    b = b.at[1:2, 0:h2].set(raw["bs1"])
    b = b.at[1:2, h2:hidden].set(raw["br1"])
    b = b.at[2:3, 0:state_dim].set(raw["bs2"])
    b = b.at[2:3, state_dim:state_dim + 1].set(raw["br2"])
    return w, b


# ---------------------------------------------------------------------------
# Wrapper
# ---------------------------------------------------------------------------
def env_model_forward(state, action, w_slab, b_slab, *,
                      state_dim, action_dim, hidden, batch_tile=256):
    """Returns (state_prediction [B, state_dim], reward [B, 1])."""
    B = state.shape[0]
    kern = functools.partial(_env_model_kernel, sd=state_dim, ad=action_dim,
                             h=hidden)
    out_shape = jax.ShapeDtypeStruct((B, hidden), jnp.float32)
    rows = w_slab.shape[0]
    brow = b_slab.shape[0]

    if B >= batch_tile and B % batch_tile == 0:
        # Large batch: shard the batch across TensorCores (v7x megacore).
        out = pl.pallas_call(
            kern,
            out_shape=out_shape,
            grid=(B // batch_tile,),
            in_specs=[
                pl.BlockSpec((batch_tile, state_dim), lambda i: (i, 0)),
                pl.BlockSpec((batch_tile, action_dim), lambda i: (i, 0)),
                pl.BlockSpec((rows, hidden), lambda i: (0, 0)),
                pl.BlockSpec((brow, hidden), lambda i: (0, 0)),
            ],
            out_specs=pl.BlockSpec((batch_tile, hidden), lambda i: (i, 0)),
            compiler_params=pltpu.CompilerParams(
                dimension_semantics=("parallel",)),
        )(state, action, w_slab, b_slab)
    else:
        # Tiny batch: single grid-less call, everything resident in VMEM.
        vmem = pl.BlockSpec(memory_space=pltpu.MemorySpace.VMEM)
        out = pl.pallas_call(
            kern,
            out_shape=out_shape,
            in_specs=[vmem] * 4,
            out_specs=vmem,
        )(state, action, w_slab, b_slab)

    return out[:, :state_dim], out[:, state_dim:state_dim + 1]


# ---------------------------------------------------------------------------
# Init + pure-JAX reference
# ---------------------------------------------------------------------------
def init_params(key, state_dim, action_dim, hidden=128):
    """PyTorch-style synthetic init; weights stored as [in, out], biases [1, out]."""
    h2 = hidden // 2
    keys = jax.random.split(key, 5)

    def lin(k, fan_in, fan_out):
        bound = 1.0 / jnp.sqrt(fan_in)
        kw, kb = jax.random.split(k)
        w = jax.random.uniform(kw, (fan_in, fan_out), jnp.float32, -bound, bound)
        b = jax.random.uniform(kb, (1, fan_out), jnp.float32, -bound, bound)
        return w, b

    w1, b1 = lin(keys[0], state_dim + action_dim, hidden)
    ws1, bs1 = lin(keys[1], hidden, h2)
    ws2, bs2 = lin(keys[2], h2, state_dim)
    wr1, br1 = lin(keys[3], hidden, h2)
    wr2, br2 = lin(keys[4], h2, 1)
    return {"w1": w1, "b1": b1,
            "ws1": ws1, "bs1": bs1, "ws2": ws2, "bs2": bs2,
            "wr1": wr1, "br1": br1, "wr2": wr2, "br2": br2}


def _reference_forward(state, action, raw):
    x = jnp.concatenate([state, action], axis=1)
    f = jnp.maximum(x @ raw["w1"] + raw["b1"], 0.0)
    hs = jnp.maximum(f @ raw["ws1"] + raw["bs1"], 0.0)
    sp = hs @ raw["ws2"] + raw["bs2"] + state
    hr = jnp.maximum(f @ raw["wr1"] + raw["br1"], 0.0)
    r = hr @ raw["wr2"] + raw["br2"]
    return sp, r


# ---------------------------------------------------------------------------
if __name__ == "__main__":
    state_dim, action_dim, hidden = 8, 2, 128
    key = jax.random.PRNGKey(0)
    k_params, k_s1, k_a1, k_s2, k_a2 = jax.random.split(key, 5)

    raw = init_params(k_params, state_dim, action_dim, hidden)
    w_slab, b_slab = pack_params(raw, state_dim, action_dim, hidden)

    # --- small batch (grid-less path) ---
    B1 = 8
    state1 = jax.random.normal(k_s1, (B1, state_dim), jnp.float32)
    action1 = jax.random.normal(k_a1, (B1, action_dim), jnp.float32)
    sp1, r1 = env_model_forward(state1, action1, w_slab, b_slab,
                                state_dim=state_dim, action_dim=action_dim,
                                hidden=hidden)
    sp1 = jax.block_until_ready(sp1)
    r1 = jax.block_until_ready(r1)
    ref_sp1, ref_r1 = _reference_forward(state1, action1, raw)
    assert sp1.shape == (B1, state_dim) and r1.shape == (B1, 1)
    assert jnp.allclose(sp1, ref_sp1, atol=1e-4, rtol=1e-4)
    assert jnp.allclose(r1, ref_r1, atol=1e-4, rtol=1e-4)

    # --- large batch (parallel batch-grid path) ---
    B2 = 512
    state2 = jax.random.normal(k_s2, (B2, state_dim), jnp.float32)
    action2 = jax.random.normal(k_a2, (B2, action_dim), jnp.float32)
    sp2, r2 = env_model_forward(state2, action2, w_slab, b_slab,
                                state_dim=state_dim, action_dim=action_dim,
                                hidden=hidden)
    sp2 = jax.block_until_ready(sp2)
    r2 = jax.block_until_ready(r2)
    ref_sp2, ref_r2 = _reference_forward(state2, action2, raw)
    assert sp2.shape == (B2, state_dim) and r2.shape == (B2, 1)
    assert jnp.allclose(sp2, ref_sp2, atol=1e-4, rtol=1e-4)
    assert jnp.allclose(r2, ref_r2, atol=1e-4, rtol=1e-4)

    print("KERNEL_OK")
</pallas_src>

<mosaic_0001>
module attributes {stable_mosaic.version = 11 : i64} {
  func.func @_env_model_kernel(%arg0: memref<8x8xf32, #tpu.memory_space<vmem>>, %arg1: memref<8x2xf32, #tpu.memory_space<vmem>>, %arg2: memref<272x128xf32, #tpu.memory_space<vmem>>, %arg3: memref<3x128xf32, #tpu.memory_space<vmem>>, %arg4: memref<8x128xf32, #tpu.memory_space<vmem>>) attributes {dimension_semantics = [], scalar_prefetch = 0 : i64, scratch_operands = 0 : i64, tpu.core_type = #tpu.core_type<tc>} {
    %c0 = arith.constant 0 : index
    %c0_0 = arith.constant 0 : index
    %0 = vector.load %arg0[%c0, %c0_0] : memref<8x8xf32, #tpu.memory_space<vmem>>, vector<8x8xf32>
    %c0_1 = arith.constant 0 : index
    %c0_2 = arith.constant 0 : index
    %1 = vector.load %arg1[%c0_1, %c0_2] : memref<8x2xf32, #tpu.memory_space<vmem>>, vector<8x2xf32>
    %c0_3 = arith.constant 0 : index
    %c0_4 = arith.constant 0 : index
    %2 = vector.load %arg3[%c0_3, %c0_4] : memref<3x128xf32, #tpu.memory_space<vmem>>, vector<3x128xf32>
    %c0_5 = arith.constant 0 : index
    %c0_6 = arith.constant 0 : index
    %3 = vector.load %arg2[%c0_5, %c0_6] : memref<272x128xf32, #tpu.memory_space<vmem>>, vector<8x128xf32>
    %cst = arith.constant dense<0.000000e+00> : vector<8x128xf32>
    %4 = tpu.matmul %0, %3, %cst {dimension_numbers = #tpu.dot_dimension_numbers<[1], [0], [0], [1], [0, 0, 1, 1], [], []>} : vector<8x8xf32>, vector<8x128xf32>, vector<8x128xf32> -> vector<8x128xf32>
    %c8 = arith.constant 8 : index
    %c0_7 = arith.constant 0 : index
    %5 = vector.load %arg2[%c8, %c0_7] : memref<272x128xf32, #tpu.memory_space<vmem>>, vector<2x128xf32>
    %cst_8 = arith.constant dense<0.000000e+00> : vector<8x128xf32>
    %6 = tpu.matmul %1, %5, %cst_8 {dimension_numbers = #tpu.dot_dimension_numbers<[1], [0], [0], [1], [0, 0, 1, 1], [], []>} : vector<8x2xf32>, vector<2x128xf32>, vector<8x128xf32> -> vector<8x128xf32>
    %7 = arith.addf %4, %6 : vector<8x128xf32>
    %8 = vector.extract_strided_slice %2 {offsets = [0, 0], sizes = [1, 128], strides = [1, 1]} : vector<3x128xf32> to vector<1x128xf32>
    %9 = vector.broadcast %8 : vector<1x128xf32> to vector<8x128xf32>
    %10 = arith.addf %7, %9 : vector<8x128xf32>
    %cst_9 = arith.constant 0.000000e+00 : f32
    %11 = vector.broadcast %cst_9 : f32 to vector<8x128xf32>
    %12 = arith.maximumf %10, %11 : vector<8x128xf32>
    %c16 = arith.constant 16 : index
    %c0_10 = arith.constant 0 : index
    %13 = vector.load %arg2[%c16, %c0_10] : memref<272x128xf32, #tpu.memory_space<vmem>>, vector<128x128xf32>
    %cst_11 = arith.constant dense<0.000000e+00> : vector<8x128xf32>
    %14 = tpu.matmul %12, %13, %cst_11 {dimension_numbers = #tpu.dot_dimension_numbers<[1], [0], [0], [1], [0, 0, 1, 1], [], []>} : vector<8x128xf32>, vector<128x128xf32>, vector<8x128xf32> -> vector<8x128xf32>
    %15 = vector.extract_strided_slice %2 {offsets = [1, 0], sizes = [1, 128], strides = [1, 1]} : vector<3x128xf32> to vector<1x128xf32>
    %16 = vector.broadcast %15 : vector<1x128xf32> to vector<8x128xf32>
    %17 = arith.addf %14, %16 : vector<8x128xf32>
    %cst_12 = arith.constant 0.000000e+00 : f32
    %18 = vector.broadcast %cst_12 : f32 to vector<8x128xf32>
    %19 = arith.maximumf %17, %18 : vector<8x128xf32>
    %c144 = arith.constant 144 : index
    %c0_13 = arith.constant 0 : index
    %20 = vector.load %arg2[%c144, %c0_13] : memref<272x128xf32, #tpu.memory_space<vmem>>, vector<128x128xf32>
    %cst_14 = arith.constant dense<0.000000e+00> : vector<8x128xf32>
    %21 = tpu.matmul %19, %20, %cst_14 {dimension_numbers = #tpu.dot_dimension_numbers<[1], [0], [0], [1], [0, 0, 1, 1], [], []>} : vector<8x128xf32>, vector<128x128xf32>, vector<8x128xf32> -> vector<8x128xf32>
    %22 = vector.extract_strided_slice %2 {offsets = [2, 0], sizes = [1, 128], strides = [1, 1]} : vector<3x128xf32> to vector<1x128xf32>
    %23 = vector.broadcast %22 : vector<1x128xf32> to vector<8x128xf32>
    %24 = arith.addf %21, %23 : vector<8x128xf32>
    %c0_15 = arith.constant 0 : index
    %c0_16 = arith.constant 0 : index
    %25 = vector.load %arg4[%c0_15, %c0_16] : memref<8x128xf32, #tpu.memory_space<vmem>>, vector<8x128xf32>
    tpu.vector_store %arg4[%c0_15, %c0_16], %24 {strides = array<i32>} : memref<8x128xf32, #tpu.memory_space<vmem>>, vector<8x128xf32>,
    %26 = vector.extract_strided_slice %24 {offsets = [0, 0], sizes = [8, 8], strides = [1, 1]} : vector<8x128xf32> to vector<8x8xf32>
    %27 = arith.addf %26, %0 : vector<8x8xf32>
    %c0_17 = arith.constant 0 : index
    %c0_18 = arith.constant 0 : index
    %28 = vector.load %arg4[%c0_17, %c0_18] : memref<8x128xf32, #tpu.memory_space<vmem>>, vector<8x8xf32>
    tpu.vector_store %arg4[%c0_17, %c0_18], %27 {strides = array<i32>} : memref<8x128xf32, #tpu.memory_space<vmem>>, vector<8x8xf32>,
    return
  }
}

</mosaic_0001>

<llo_original>
// kernel: tpu_custom_call.1
$region0: #{tpu_custom_call.1}
  #allocation0 [shape = 'u32[]', space=smem, size = 0x4, offset = 0x4, fixed_abs, tag = 'smem constant byte address 0x4 - core index']
  #allocation1 [shape = 'u32[144,128]{1,0:T(1,128)}', space=vmem, size = 0x12000, scoped, tag = 'internal scratch']
  %s0 = inlined_call_operand.vmem [shape: f32[8,8], index: 0, kind: input, shape index: {}]
  %s1 = inlined_call_operand.vmem [shape: f32[8,2], index: 1, kind: input, shape index: {}]
  %s2 = inlined_call_operand.hbm [shape: f32[272,128], index: 2, kind: input, shape index: {}]
  %s3 = inlined_call_operand.vmem [shape: f32[3,128], index: 3, kind: input, shape index: {}]
  %s4 = inlined_call_operand.hbm [shape: f32[8,128], index: 4, kind: output, shape index: {}]
  %s5 = sld [smem:[#allocation0]]
  $region30: #{tpu_custom_call.1} parent=0
    _
  %s7 = ssub.s32 1, %s5
  %s8 = scalar_select 0, %s7, %s5
  $region1: #{tpu_custom_call.1} parent=0
    #allocation2 [shape = 'u8[139264]{0}', space=vmem, size = 0x22000, scoped, tag = 'input window, operand 2, single buffered']
    #allocation3 [shape = 's32[1]{0}', space=sflag, size = 0x4, scoped, tag = 'scoped memory for tpu_custom_call.1']
    #allocation4 [shape = 's32[1]{0}', space=sflag, size = 0x4, scoped, tag = 'scoped memory for tpu_custom_call.1']
    #allocation5 [shape = 'u8[4096]{0}', space=vmem, size = 0x1000, scoped, tag = 'output window, operand 0, single buffered']
    %9 = vsyncpa [#allocation3], 0
    %10 = vsyncpa [#allocation4], 0
    // Predicated region
    $region2: #{tpu_custom_call.1} parent=1 // pred_check
      _
    $region3: #{tpu_custom_call.1} parent=1 // pred_check_branch
      %12 = sbr.rel (0) target = $region5
    $region4: #{tpu_custom_call.1} parent=1 // pred_region
      _
    $region5: #{tpu_custom_call.1} parent=1 // pred_fallthru
      _
    // Predicated region
    $region6: #{tpu_custom_call.1} parent=1 // pred_check
      _
    $region7: #{tpu_custom_call.1} parent=1 // pred_check_branch
      %14 = sbr.rel (0) target = $region9
    $region8: #{tpu_custom_call.1} parent=1 // pred_region
      _
    $region9: #{tpu_custom_call.1} parent=1 // pred_fallthru
      _
    // Predicated region
    $region10: #{tpu_custom_call.1} parent=1 // pred_check
      _
    $region11: #{tpu_custom_call.1} parent=1 // pred_check_branch
      %16 = sbr.rel (0) target = $region13
    $region12: #{tpu_custom_call.1} parent=1 // pred_region
      %s18 = ssub.s32 4352, 4352
      %19 = vsyncadd [#allocation3], %s18
      %s20 = sshll.u32 [#allocation2], 4
      %s21 = int_to_ptr.vmem [resolvable:$true] %s20
      %26 = dma.hbm_to_vmem [thread:$0]  %s2, 4352, %s21, [#allocation3], 128, 128, 8
    $region13: #{tpu_custom_call.1} parent=1 // pred_fallthru
      _
    // Predicated region
    $region14: #{tpu_custom_call.1} parent=1 // pred_check
      _
    $region15: #{tpu_custom_call.1} parent=1 // pred_check_branch
      %28 = sbr.rel (0) target = $region17
    $region16: #{tpu_custom_call.1} parent=1 // pred_region
      _
    $region17: #{tpu_custom_call.1} parent=1 // pred_fallthru
      _
    // Predicated region
    $region18: #{tpu_custom_call.1} parent=1 // pred_check
      _
    $region19: #{tpu_custom_call.1} parent=1 // pred_check_branch
      %30 = sbr.rel (0) target = $region21
    $region20: #{tpu_custom_call.1} parent=1 // pred_region
      %31 = dma.done [#allocation3], 4352
    $region21: #{tpu_custom_call.1} parent=1 // pred_fallthru
      _
    %v32 = vld [vmem:[%s0] sm:$0xff]
    %v33 = vld [vmem:[%s1] sm:$0xff]
    %v34 = vld [vmem:[%s3] sm:$0x7]
    %v35 = vld [vmem:[#allocation2] sm:$0xff]
    %v36 = vld [vmem:[#allocation2 + $0x8] sm:$0x3]
    %vm37 = vcmask 15360
    %v39 = vsel %vm37, %v33, 0
    %vm41 = vcmask 1041408
    %v43 = vsel %vm41, %v36, 0
    %45 = vmatprep.subr.mxu0 0.0
    %46 = vmatpush1.msra.mxu0 %v43
    %47 = vmatprep.subr.mxu0 0.0
    %48 = vmatpush1.msra.mxu0 0.0
    %49 = vmatprep.subr.mxu0 0.0
    %50 = vmatpush1.msra.mxu0 0.0
    %51 = vmatprep.subr.mxu0 0.0
    %52 = vmatpush1.msra.mxu0 0.0
    %53 = vmatprep.subr.mxu0 0.0
    %54 = vmatpush1.msra.mxu0 0.0
    %55 = vmatprep.subr.mxu0 0.0
    %56 = vmatpush1.msra.mxu0 0.0
    %57 = vmatprep.subr.mxu0 0.0
    %58 = vmatpush1.msra.mxu0 0.0
    %59 = vmatprep.subr.mxu0 0.0
    %60 = vmatpush1.msra.mxu0 0.0
    %61 = vmatprep.subr.mxu0 0.0
    %62 = vmatpush1.msra.mxu0 0.0
    %63 = vmatprep.subr.mxu0 0.0
    %64 = vmatpush1.msra.mxu0 0.0
    %65 = vmatprep.subr.mxu0 0.0
    %66 = vmatpush1.msra.mxu0 0.0
    %67 = vmatprep.subr.mxu0 0.0
    %68 = vmatpush1.msra.mxu0 0.0
    %69 = vmatprep.subr.mxu0 0.0
    %70 = vmatpush1.msra.mxu0 0.0
    %71 = vmatprep.subr.mxu0 0.0
    %72 = vmatpush1.msra.mxu0 0.0
    %73 = vmatprep.subr.mxu0 0.0
    %74 = vmatpush1.msra.mxu0 0.0
    %75 = vmatprep.subr.mxu0 0.0
    %76 = vmatpush1.msra.mxu0 0.0
    %77 = vmatprep.subr.mxu0 0.0
    %78 = vmatpush1.msra.mxu0 0.0
    %79 = vmatprep.subr.mxu0 0.0
    %80 = vmatpush1.msra.mxu0 0.0
    %81 = vmatprep.subr.mxu0 0.0
    %82 = vmatpush1.msra.mxu0 0.0
    %83 = vmatprep.subr.mxu0 0.0
    %84 = vmatpush1.msra.mxu0 0.0
    %85 = vmatprep.subr.mxu0 0.0
    %86 = vmatpush1.msra.mxu0 0.0
    %87 = vmatprep.subr.mxu0 0.0
    %88 = vmatpush1.msra.mxu0 0.0
    %89 = vmatprep.subr.mxu0 0.0
    %90 = vmatpush1.msra.mxu0 0.0
    %91 = vmatprep.subr.mxu0 0.0
    %92 = vmatpush1.msra.mxu0 0.0
    %93 = vmatprep.subr.mxu0 0.0
    %94 = vmatpush1.msra.mxu0 0.0
    %95 = vmatprep.subr.mxu0 0.0
    %96 = vmatpush1.msra.mxu0 0.0
    %97 = vmatprep.subr.mxu0 0.0
    %98 = vmatpush1.msra.mxu0 0.0
    %99 = vmatprep.subr.mxu0 0.0
    %100 = vmatpush1.msra.mxu0 0.0
    %101 = vmatprep.subr.mxu0 0.0
    %102 = vmatpush1.msra.mxu0 0.0
    %103 = vmatprep.subr.mxu0 0.0
    %104 = vmatpush1.msra.mxu0 0.0
    %105 = vmatprep.subr.mxu0 0.0
    %106 = vmatpush1.msra.mxu0 0.0
    %107 = vmatprep.subr.mxu0 0.0
    %108 = vmatpush1.msra.mxu0 0.0
    %109 = vmatprep.mubr.f32.mxu0 0.0
    %110 = vmatmul.mubr.f32.gmra.mrb[0].mxu0 %v39
    %v111 = vpop.f32.mrb[0].mxu0
    %v112 = vadd.f32 0.0, %v111
    %v113 = vpop.f32.mrb[0].mxu0
    %114 = vdwg.mxu0
    %vm115 = vcmask 64512
    %v117 = vsel %vm115, %v32, 0
    %119 = vmatprep.subr.mxu0 0.0
    %120 = vmatpush1.msra.mxu0 %v35
    %121 = vmatprep.subr.mxu0 0.0
    %122 = vmatpush1.msra.mxu0 0.0
    %123 = vmatprep.subr.mxu0 0.0
    %124 = vmatpush1.msra.mxu0 0.0
    %125 = vmatprep.subr.mxu0 0.0
    %126 = vmatpush1.msra.mxu0 0.0
    %127 = vmatprep.subr.mxu0 0.0
    %128 = vmatpush1.msra.mxu0 0.0
    %129 = vmatprep.subr.mxu0 0.0
    %130 = vmatpush1.msra.mxu0 0.0
    %131 = vmatprep.subr.mxu0 0.0
    %132 = vmatpush1.msra.mxu0 0.0
    %133 = vmatprep.subr.mxu0 0.0
    %134 = vmatpush1.msra.mxu0 0.0
    %135 = vmatprep.subr.mxu0 0.0
    %136 = vmatpush1.msra.mxu0 0.0
    %137 = vmatprep.subr.mxu0 0.0
    %138 = vmatpush1.msra.mxu0 0.0
    %139 = vmatprep.subr.mxu0 0.0
    %140 = vmatpush1.msra.mxu0 0.0
    %141 = vmatprep.subr.mxu0 0.0
    %142 = vmatpush1.msra.mxu0 0.0
    %143 = vmatprep.subr.mxu0 0.0
    %144 = vmatpush1.msra.mxu0 0.0
    %145 = vmatprep.subr.mxu0 0.0
    %146 = vmatpush1.msra.mxu0 0.0
    %147 = vmatprep.subr.mxu0 0.0
    %148 = vmatpush1.msra.mxu0 0.0
    %149 = vmatprep.subr.mxu0 0.0
    %150 = vmatpush1.msra.mxu0 0.0
    %151 = vmatprep.subr.mxu0 0.0
    %152 = vmatpush1.msra.mxu0 0.0
    %153 = vmatprep.subr.mxu0 0.0
    %154 = vmatpush1.msra.mxu0 0.0
    %155 = vmatprep.subr.mxu0 0.0
    %156 = vmatpush1.msra.mxu0 0.0
    %157 = vmatprep.subr.mxu0 0.0
    %158 = vmatpush1.msra.mxu0 0.0
    %159 = vmatprep.subr.mxu0 0.0
    %160 = vmatpush1.msra.mxu0 0.0
    %161 = vmatprep.subr.mxu0 0.0
    %162 = vmatpush1.msra.mxu0 0.0
    %163 = vmatprep.subr.mxu0 0.0
    %164 = vmatpush1.msra.mxu0 0.0
    %165 = vmatprep.subr.mxu0 0.0
    %166 = vmatpush1.msra.mxu0 0.0
    %167 = vmatprep.subr.mxu0 0.0
    %168 = vmatpush1.msra.mxu0 0.0
    %169 = vmatprep.subr.mxu0 0.0
    %170 = vmatpush1.msra.mxu0 0.0
    %171 = vmatprep.subr.mxu0 0.0
    %172 = vmatpush1.msra.mxu0 0.0
    %173 = vmatprep.subr.mxu0 0.0
    %174 = vmatpush1.msra.mxu0 0.0
    %175 = vmatprep.subr.mxu0 0.0
    %176 = vmatpush1.msra.mxu0 0.0
    %177 = vmatprep.subr.mxu0 0.0
    %178 = vmatpush1.msra.mxu0 0.0
    %179 = vmatprep.subr.mxu0 0.0
    %180 = vmatpush1.msra.mxu0 0.0
    %181 = vmatprep.subr.mxu0 0.0
    %182 = vmatpush1.msra.mxu0 0.0
    %183 = vmatprep.mubr.f32.mxu0 0.0
    %184 = vmatmul.mubr.f32.gmra.mrb[0].mxu0 %v117
    %v185 = vpop.f32.mrb[0].mxu0
    %v186 = vadd.f32 %v112, %v185
    %v187 = vpop.f32.mrb[0].mxu0
    %188 = vdwg.mxu0
    %v189 = vlaneseq
    %v190 = vshrl.u32 %v189, 7
    %v191 = vsub.s32 0, %v190
    %v192 = vrot.slane %v34, %v191
    %v193 = vadd.f32 %v186, %v192
    %v194 = vmax.f32 %v193, 0.0
    %v195 = vld [vmem:[#allocation2 + $0x10] sm:$0xff]
    %v196 = vld [vmem:[#allocation2 + $0x18] sm:$0xff]
    %v197 = vld [vmem:[#allocation2 + $0x20] sm:$0xff]
    %v198 = vld [vmem:[#allocation2 + $0x28] sm:$0xff]
    %v199 = vld [vmem:[#allocation2 + $0x30] sm:$0xff]
    %v200 = vld [vmem:[#allocation2 + $0x38] sm:$0xff]
    %v201 = vld [vmem:[#allocation2 + $0x40] sm:$0xff]
    %v202 = vld [vmem:[#allocation2 + $0x48] sm:$0xff]
    %v203 = vld [vmem:[#allocation2 + $0x50] sm:$0xff]
    %v204 = vld [vmem:[#allocation2 + $0x58] sm:$0xff]
    %v205 = vld [vmem:[#allocation2 + $0x60] sm:$0xff]
    %v206 = vld [vmem:[#allocation2 + $0x68] sm:$0xff]
    %v207 = vld [vmem:[#allocation2 + $0x70] sm:$0xff]
    %v208 = vld [vmem:[#allocation2 + $0x78] sm:$0xff]
    %v209 = vld [vmem:[#allocation2 + $0x80] sm:$0xff]
    %v210 = vld [vmem:[#allocation2 + $0x88] sm:$0xff]
    %v211 = vlaneseq
    %v212 = vshrl.u32 %v211, 7
    %v213 = vsub.s32 1, %v212
    %v214 = vrot.slane %v34, %v213
    %215 = vmatprep.subr.mxu0 0.0
    %216 = vmatpush1.msra.mxu0 %v195
    %217 = vmatprep.subr.mxu0 0.0
    %218 = vmatpush1.msra.mxu0 %v196
    %219 = vmatprep.subr.mxu0 0.0
    %220 = vmatpush1.msra.mxu0 %v197
    %221 = vmatprep.subr.mxu0 0.0
    %222 = vmatpush1.msra.mxu0 %v198
    %223 = vmatprep.subr.mxu0 0.0
    %224 = vmatpush1.msra.mxu0 %v199
    %225 = vmatprep.subr.mxu0 0.0
    %226 = vmatpush1.msra.mxu0 %v200
    %227 = vmatprep.subr.mxu0 0.0
    %228 = vmatpush1.msra.mxu0 %v201
    %229 = vmatprep.subr.mxu0 0.0
    %230 = vmatpush1.msra.mxu0 %v202
    %231 = vmatprep.subr.mxu0 0.0
    %232 = vmatpush1.msra.mxu0 %v203
    %233 = vmatprep.subr.mxu0 0.0
    %234 = vmatpush1.msra.mxu0 %v204
    %235 = vmatprep.subr.mxu0 0.0
    %236 = vmatpush1.msra.mxu0 %v205
    %237 = vmatprep.subr.mxu0 0.0
    %238 = vmatpush1.msra.mxu0 %v206
    %239 = vmatprep.subr.mxu0 0.0
    %240 = vmatpush1.msra.mxu0 %v207
    %241 = vmatprep.subr.mxu0 0.0
    %242 = vmatpush1.msra.mxu0 %v208
    %243 = vmatprep.subr.mxu0 0.0
    %244 = vmatpush1.msra.mxu0 %v209
    %245 = vmatprep.subr.mxu0 0.0
    %246 = vmatpush1.msra.mxu0 %v210
    %247 = vmatprep.subr.mxu0 0.0
    %248 = vmatpush1.msra.mxu0 0.0
    %249 = vmatprep.subr.mxu0 0.0
    %250 = vmatpush1.msra.mxu0 0.0
    %251 = vmatprep.subr.mxu0 0.0
    %252 = vmatpush1.msra.mxu0 0.0
    %253 = vmatprep.subr.mxu0 0.0
    %254 = vmatpush1.msra.mxu0 0.0
    %255 = vmatprep.subr.mxu0 0.0
    %256 = vmatpush1.msra.mxu0 0.0
    %257 = vmatprep.subr.mxu0 0.0
    %258 = vmatpush1.msra.mxu0 0.0
    %259 = vmatprep.subr.mxu0 0.0
    %260 = vmatpush1.msra.mxu0 0.0
    %261 = vmatprep.subr.mxu0 0.0
    %262 = vmatpush1.msra.mxu0 0.0
    %263 = vmatprep.subr.mxu0 0.0
    %264 = vmatpush1.msra.mxu0 0.0
    %265 = vmatprep.subr.mxu0 0.0
    %266 = vmatpush1.msra.mxu0 0.0
    %267 = vmatprep.subr.mxu0 0.0
    %268 = vmatpush1.msra.mxu0 0.0
    %269 = vmatprep.subr.mxu0 0.0
    %270 = vmatpush1.msra.mxu0 0.0
    %271 = vmatprep.subr.mxu0 0.0
    %272 = vmatpush1.msra.mxu0 0.0
    %273 = vmatprep.subr.mxu0 0.0
    %274 = vmatpush1.msra.mxu0 0.0
    %275 = vmatprep.subr.mxu0 0.0
    %276 = vmatpush1.msra.mxu0 0.0
    %277 = vmatprep.subr.mxu0 0.0
    %278 = vmatpush1.msra.mxu0 0.0
    %279 = vmatprep.mubr.f32.mxu0 0.0
    %280 = vmatmul.mubr.f32.gmra.mrb[0].mxu0 %v194
    %v281 = vpop.f32.mrb[0].mxu0
    %v282 = vadd.f32 %v214, %v281
    %v283 = vpop.f32.mrb[0].mxu0
    %284 = vdwg.mxu0
    %v285 = vmax.f32 %v282, 0.0
    %v286 = vld [vmem:[#allocation2 + $0x90] sm:$0xff]
    %v287 = vld [vmem:[#allocation2 + $0x98] sm:$0xff]
    %v288 = vld [vmem:[#allocation2 + $0xa0] sm:$0xff]
    %v289 = vld [vmem:[#allocation2 + $0xa8] sm:$0xff]
    %v290 = vld [vmem:[#allocation2 + $0xb0] sm:$0xff]
    %v291 = vld [vmem:[#allocation2 + $0xb8] sm:$0xff]
    %v292 = vld [vmem:[#allocation2 + $0xc0] sm:$0xff]
    %v293 = vld [vmem:[#allocation2 + $0xc8] sm:$0xff]
    %v294 = vld [vmem:[#allocation2 + $0xd0] sm:$0xff]
    %v295 = vld [vmem:[#allocation2 + $0xd8] sm:$0xff]
    %v296 = vld [vmem:[#allocation2 + $0xe0] sm:$0xff]
    %v297 = vld [vmem:[#allocation2 + $0xe8] sm:$0xff]
    %v298 = vld [vmem:[#allocation2 + $0xf0] sm:$0xff]
    %v299 = vld [vmem:[#allocation2 + $0xf8] sm:$0xff]
    %v300 = vld [vmem:[#allocation2 + $0x100] sm:$0xff]
    %v301 = vld [vmem:[#allocation2 + $0x108] sm:$0xff]
    %v302 = vlaneseq
    %v303 = vshrl.u32 %v302, 7
    %v304 = vsub.s32 2, %v303
    %v305 = vrot.slane %v34, %v304
    %306 = vmatprep.subr.mxu0 0.0
    %307 = vmatpush1.msra.mxu0 %v286
    %308 = vmatprep.subr.mxu0 0.0
    %309 = vmatpush1.msra.mxu0 %v287
    %310 = vmatprep.subr.mxu0 0.0
    %311 = vmatpush1.msra.mxu0 %v288
    %312 = vmatprep.subr.mxu0 0.0
    %313 = vmatpush1.msra.mxu0 %v289
    %314 = vmatprep.subr.mxu0 0.0
    %315 = vmatpush1.msra.mxu0 %v290
    %316 = vmatprep.subr.mxu0 0.0
    %317 = vmatpush1.msra.mxu0 %v291
    %318 = vmatprep.subr.mxu0 0.0
    %319 = vmatpush1.msra.mxu0 %v292
    %320 = vmatprep.subr.mxu0 0.0
    %321 = vmatpush1.msra.mxu0 %v293
    %322 = vmatprep.subr.mxu0 0.0
    %323 = vmatpush1.msra.mxu0 %v294
    %324 = vmatprep.subr.mxu0 0.0
    %325 = vmatpush1.msra.mxu0 %v295
    %326 = vmatprep.subr.mxu0 0.0
    %327 = vmatpush1.msra.mxu0 %v296
    %328 = vmatprep.subr.mxu0 0.0
    %329 = vmatpush1.msra.mxu0 %v297
    %330 = vmatprep.subr.mxu0 0.0
    %331 = vmatpush1.msra.mxu0 %v298
    %332 = vmatprep.subr.mxu0 0.0
    %333 = vmatpush1.msra.mxu0 %v299
    %334 = vmatprep.subr.mxu0 0.0
    %335 = vmatpush1.msra.mxu0 %v300
    %336 = vmatprep.subr.mxu0 0.0
    %337 = vmatpush1.msra.mxu0 %v301
    %338 = vmatprep.subr.mxu0 0.0
    %339 = vmatpush1.msra.mxu0 0.0
    %340 = vmatprep.subr.mxu0 0.0
    %341 = vmatpush1.msra.mxu0 0.0
    %342 = vmatprep.subr.mxu0 0.0
    %343 = vmatpush1.msra.mxu0 0.0
    %344 = vmatprep.subr.mxu0 0.0
    %345 = vmatpush1.msra.mxu0 0.0
    %346 = vmatprep.subr.mxu0 0.0
    %347 = vmatpush1.msra.mxu0 0.0
    %348 = vmatprep.subr.mxu0 0.0
    %349 = vmatpush1.msra.mxu0 0.0
    %350 = vmatprep.subr.mxu0 0.0
    %351 = vmatpush1.msra.mxu0 0.0
    %352 = vmatprep.subr.mxu0 0.0
    %353 = vmatpush1.msra.mxu0 0.0
    %354 = vmatprep.subr.mxu0 0.0
    %355 = vmatpush1.msra.mxu0 0.0
    %356 = vmatprep.subr.mxu0 0.0
    %357 = vmatpush1.msra.mxu0 0.0
    %358 = vmatprep.subr.mxu0 0.0
    %359 = vmatpush1.msra.mxu0 0.0
    %360 = vmatprep.subr.mxu0 0.0
    %361 = vmatpush1.msra.mxu0 0.0
    %362 = vmatprep.subr.mxu0 0.0
    %363 = vmatpush1.msra.mxu0 0.0
    %364 = vmatprep.subr.mxu0 0.0
    %365 = vmatpush1.msra.mxu0 0.0
    %366 = vmatprep.subr.mxu0 0.0
    %367 = vmatpush1.msra.mxu0 0.0
    %368 = vmatprep.subr.mxu0 0.0
    %369 = vmatpush1.msra.mxu0 0.0
    %370 = vmatprep.mubr.f32.mxu0 0.0
    %371 = vmatmul.mubr.f32.gmra.mrb[0].mxu0 %v285
    %v372 = vpop.f32.mrb[0].mxu0
    %v373 = vadd.f32 %v305, %v372
    %v374 = vpop.f32.mrb[0].mxu0
    %375 = vdwg.mxu0
    %376 = vst [vmem:[#allocation5] sm:$0xff] %v373
    %v377 = vadd.f32 %v373, %v32
    %378 = vst.msk [vmem:[#allocation5] sm:$0xff] %vm115, %v377
    // Predicated region
    $region22: #{tpu_custom_call.1} parent=1 // pred_check
      _
    $region23: #{tpu_custom_call.1} parent=1 // pred_check_branch
      %380 = sbr.rel (0) target = $region25
    $region24: #{tpu_custom_call.1} parent=1 // pred_region
      %s382 = ssub.s32 128, 128
      %383 = vsyncadd [#allocation4], %s382
      %s385 = sshll.u32 [#allocation5], 4
      %s386 = int_to_ptr.vmem [resolvable:$true] %s385
      %388 = dma.vmem_to_hbm [thread:$0]  %s386, 128, %s4, [#allocation4]
    $region25: #{tpu_custom_call.1} parent=1 // pred_fallthru
      _
    // Predicated region
    $region26: #{tpu_custom_call.1} parent=1 // pred_check
      _
    $region27: #{tpu_custom_call.1} parent=1 // pred_check_branch
      %390 = sbr.rel (0) target = $region29
    $region28: #{tpu_custom_call.1} parent=1 // pred_region
      %391 = dma.done [#allocation4], 128
    $region29: #{tpu_custom_call.1} parent=1 // pred_fallthru
      _
    %392 = vsyncpa [#allocation3], 1
    %393 = vsyncpa [#allocation4], 1

</llo_original>
